<compile_context>
chip_gen: v6e
topology: v6e:2x2x1
jax: 0.10.0
libtpu: 0.0.40
codegen_flags: <defaults>
</compile_context>

<pallas_src>
import functools

import jax
import jax.numpy as jnp
from jax.experimental import pallas as pl
from jax.experimental.pallas import tpu as pltpu

KERNEL_SIZE = 5       # module default is 21; kept small for the synthetic test
SIGMA_SPACE = 32.0
SIGMA_LUMA = 8.0
LAM = 128.0


def _round_up(x, m):
    return (x + m - 1) // m * m


def _neighbor_diffs(img, K):
    """img: (H, W) -> (K, K, H, W): center - replicate-padded neighbor at offset (i, j)."""
    c = (K - 1) // 2
    H, W = img.shape
    pad = jnp.pad(img, c, mode="edge")
    rows = []
    for i in range(K):
        rows.append(jnp.stack([img - pad[i:i + H, j:j + W] for j in range(K)]))
    return jnp.stack(rows)


def build_w_ij(reference, K=KERNEL_SIZE, sigma_space=SIGMA_SPACE, sigma_luma=SIGMA_LUMA):
    """Bilateral affinities, same math as BilateralSolverLocal.__init__ (plain-JAX glue).

    Returns (K, K, H, W) indexed by neighbor offset (i, j); the center plane
    (c, c) is zeroed (that tap is skipped in the PyTorch weight enumeration).
    NOTE: torch.linspace(0, size, size) (endpoints included) is reproduced
    verbatim to match the reference module's position grid.
    """
    H, W = reference.shape[0], reference.shape[1]
    if reference.ndim == 2:
        reference = reference[:, :, None]
    c = (K - 1) // 2
    pos_x = jnp.tile(jnp.linspace(0.0, W, W)[None, :], (H, 1)).astype(jnp.float32)
    pos_y = jnp.tile(jnp.linspace(0.0, H, H)[:, None], (1, W)).astype(jnp.float32)
    px = _neighbor_diffs(pos_x, K)
    py = _neighbor_diffs(pos_y, K)
    logw = -(px ** 2 + py ** 2) / (2.0 * sigma_space ** 2)
    for ch in range(reference.shape[-1]):
        rc = _neighbor_diffs(reference[:, :, ch].astype(jnp.float32), K)
        logw = logw - rc ** 2 / (2.0 * sigma_luma ** 2)
    w = jnp.exp(logw)
    return w.at[c, c].set(0.0)    # exclude the center tap


def _loss_kernel(p_ref, img_ref, tgt_ref, w_ref, loss_ref, acc_ref,
                 *, K, H, W, Hp, Wp, lam):
    """Grid axis 0 = column offset j (reduction axis, 'arbitrary').

    p_ref:   (1, Hb, Wp)  column-shifted replicate-padded output (streamed, small)
    img_ref: (Hp, Wp)     output image (center), zero-padded, resident
    tgt_ref: (Hp, Wp)     target image, zero-padded, resident
    w_ref:   (K, Hp, Wp)  bf16 affinity planes for this column offset (streamed)
    acc_ref: (Hp, Wp)     f32 accumulator of w * diff^2 (VMEM scratch)
    """
    j = pl.program_id(0)

    @pl.when(j == 0)
    def _():
        acc_ref[...] = jnp.zeros_like(acc_ref)

    center = img_ref[...]                       # (Hp, Wp) f32
    pj = p_ref[0]                               # (Hb, Wp) f32, column shift pre-applied

    acc = acc_ref[...]
    for i in range(K):                          # static unroll: sublane-only row slices
        diff = center - pj[i:i + Hp, :]
        acc = acc + w_ref[i].astype(jnp.float32) * (diff * diff)
    acc_ref[...] = acc

    @pl.when(j == pl.num_programs(0) - 1)
    def _():
        smooth_sum = jnp.sum(acc_ref[...])      # the ONLY cross-lane reduction
        fid_sum = jnp.sum((center - tgt_ref[...]) ** 2)
        smooth_mean = smooth_sum / jnp.float32((K * K - 1) * H * W)
        loss = (jnp.float32(W * H) * jnp.float32(lam) * smooth_mean
                + fid_sum / jnp.float32(H * W))
        loss_ref[...] = loss.reshape(1, 1)


def bilateral_loss(output, target, w4, K=KERNEL_SIZE, lam=LAM, w_dtype=jnp.bfloat16):
    """forward(): W*H*lam * mean(w_ij * conv_ij(output)^2) + mean((output-target)^2)."""
    H, W = output.shape
    c = (K - 1) // 2
    Hp = _round_up(H, 8)
    Wp = _round_up(W, 128)
    Hb = _round_up(Hp + 2 * c, 8)

    out32 = output.astype(jnp.float32)
    tgt32 = target.astype(jnp.float32)

    # replicate ("edge") padding == Conv2d padding_mode='replicate', then
    # zero-extend to lane/sublane-aligned working sizes.
    rep = jnp.pad(out32, c, mode="edge")                         # (H+2c, W+2c)
    rep = jnp.pad(rep, ((0, Hb - (H + 2 * c)), (0, Wp - W)))     # (Hb, Wp+2c)
    # hoist ALL lane shifts out of the kernel: K column-shifted copies, one per step
    p_stack = jnp.stack([rep[:, j:j + Wp] for j in range(K)])    # (K, Hb, Wp)

    img = jnp.pad(out32, ((0, Hp - H), (0, Wp - W)))             # (Hp, Wp)
    tgt = jnp.pad(tgt32, ((0, Hp - H), (0, Wp - W)))             # (Hp, Wp)

    # affinities: zero-pad spatially (padding contributes 0), reorder to
    # column-major (j, i) blocks so each grid step streams K contiguous planes,
    # and store in bf16 (dominant HBM traffic; accumulation stays f32).
    w_pad = jnp.pad(w4, ((0, 0), (0, 0), (0, Hp - H), (0, Wp - W)))
    w_stream = jnp.transpose(w_pad, (1, 0, 2, 3)).reshape(K * K, Hp, Wp).astype(w_dtype)

    kernel = functools.partial(_loss_kernel, K=K, H=H, W=W, Hp=Hp, Wp=Wp, lam=lam)

    # TODO(synk): for production sizes (K=21, megapixel images) add a second,
    # 'parallel' row-tile grid axis (per-tile partial sums reduced in the
    # wrapper) so w blocks stay within v7x's smaller VMEM and the work shards
    # across its two TensorCores.
    out = pl.pallas_call(
        kernel,
        out_shape=jax.ShapeDtypeStruct((1, 1), jnp.float32),
        grid_spec=pltpu.PrefetchScalarGridSpec(
            num_scalar_prefetch=0,
            grid=(K,),                                    # reduction over column offsets
            in_specs=[
                pl.BlockSpec((1, Hb, Wp), lambda j: (j, 0, 0)),   # shifted padded output
                pl.BlockSpec((Hp, Wp), lambda j: (0, 0)),         # center (resident)
                pl.BlockSpec((Hp, Wp), lambda j: (0, 0)),         # target (resident)
                pl.BlockSpec((K, Hp, Wp), lambda j: (j, 0, 0)),   # streamed w_ij block
            ],
            out_specs=pl.BlockSpec((1, 1), lambda j: (0, 0)),
            scratch_shapes=[pltpu.VMEM((Hp, Wp), jnp.float32)],
        ),
        compiler_params=pltpu.CompilerParams(
            dimension_semantics=("arbitrary",),
            vmem_limit_bytes=48 * 1024 * 1024,
        ),
    )(p_stack, img, tgt, w_stream)
    return out[0, 0]


def bilateral_loss_ref(output, target, w4, K=KERNEL_SIZE, lam=LAM):
    """Pure-JAX reference of the PyTorch forward, for verification."""
    H, W = output.shape
    c = (K - 1) // 2
    out32 = output.astype(jnp.float32)
    rep = jnp.pad(out32, c, mode="edge")
    acc = jnp.float32(0.0)
    for i in range(K):
        for j in range(K):
            d = out32 - rep[i:i + H, j:j + W]
            acc = acc + jnp.sum(w4[i, j] * d * d)        # w4[c, c] == 0
    smooth_mean = acc / ((K * K - 1) * H * W)
    fid = jnp.mean((out32 - target.astype(jnp.float32)) ** 2)
    return W * H * lam * smooth_mean + fid


if __name__ == "__main__":
    key = jax.random.PRNGKey(0)
    H, W, C = 16, 16, 3
    K = KERNEL_SIZE
    k1, k2, k3 = jax.random.split(key, 3)

    # synthetic "image" ctor args in [0, 255], like the np.ndarray arguments
    reference = jax.random.uniform(k1, (H, W, C), jnp.float32, 0.0, 255.0)
    target_raw = jax.random.uniform(k2, (H, W), jnp.float32, 0.0, 255.0)

    target = target_raw / 255.0                          # self.target = target / 255
    # self.output is initialised to target/255 and then optimised; perturb it
    # slightly so both the smoothness and fidelity terms are exercised.
    output = target + 0.05 * jax.random.normal(k3, (H, W), jnp.float32)

    # __init__ parameter setup (plain JAX). Affinities are stored/streamed in
    # bf16; quantise once here so kernel and reference see identical values.
    w4 = build_w_ij(reference, K=K)                      # (K, K, H, W) f32
    w4 = w4.astype(jnp.bfloat16).astype(jnp.float32)

    loss = bilateral_loss(output, target, w4, K=K, lam=LAM)
    loss = jax.block_until_ready(loss)

    ref_loss = bilateral_loss_ref(output, target, w4, K=K, lam=LAM)
    assert jnp.allclose(loss, ref_loss, rtol=1e-4, atol=1e-5), (loss, ref_loss)
    print("KERNEL_OK")
</pallas_src>

<mosaic_0001>
module attributes {stable_mosaic.version = 11 : i64} {
  func.func @_loss_kernel(%arg0: i32, %arg1: memref<1x24x128xf32, #tpu.memory_space<vmem>>, %arg2: memref<16x128xf32, #tpu.memory_space<vmem>>, %arg3: memref<16x128xf32, #tpu.memory_space<vmem>>, %arg4: memref<5x16x128xbf16, #tpu.memory_space<vmem>>, %arg5: memref<1x1xf32, #tpu.memory_space<vmem>>, %arg6: memref<16x128xf32, #tpu.memory_space<vmem>>) attributes {dimension_semantics = [#tpu.dimension_semantics<arbitrary>], iteration_bounds = array<i64: 5>, scalar_prefetch = 0 : i64, scratch_operands = 1 : i64, tpu.core_type = #tpu.core_type<tc>, window_params = [{transform_indices = @transform_0, window_bounds = array<i64: 1, 24, 128>}, {pipeline_mode = #tpu.pipeline_mode<synchronous>, transform_indices = @transform_1, window_bounds = array<i64: 16, 128>}, {pipeline_mode = #tpu.pipeline_mode<synchronous>, transform_indices = @transform_2, window_bounds = array<i64: 16, 128>}, {transform_indices = @transform_3, window_bounds = array<i64: 5, 16, 128>}, {pipeline_mode = #tpu.pipeline_mode<synchronous>, transform_indices = @transform_4, window_bounds = array<i64: 1, 1>}]} {
    %c0_i32 = arith.constant 0 : i32
    %0 = arith.cmpi eq, %arg0, %c0_i32 : i32
    %1 = arith.extui %0 : i1 to i32
    %c0_i32_0 = arith.constant 0 : i32
    %2 = arith.cmpi ne, %1, %c0_i32_0 : i32
    scf.if %2 {
      %cst = arith.constant 0.000000e+00 : f32
      %51 = vector.broadcast %cst : f32 to vector<16x128xf32>
      %c0_21 = arith.constant 0 : index
      %c0_22 = arith.constant 0 : index
      %52 = vector.load %arg6[%c0_21, %c0_22] : memref<16x128xf32, #tpu.memory_space<vmem>>, vector<16x128xf32>
      tpu.vector_store %arg6[%c0_21, %c0_22], %51 {strides = array<i32>} : memref<16x128xf32, #tpu.memory_space<vmem>>, vector<16x128xf32>,
    } else {
    }
    %c0 = arith.constant 0 : index
    %c0_1 = arith.constant 0 : index
    %3 = vector.load %arg2[%c0, %c0_1] : memref<16x128xf32, #tpu.memory_space<vmem>>, vector<16x128xf32>
    %c0_2 = arith.constant 0 : index
    %c0_3 = arith.constant 0 : index
    %c0_4 = arith.constant 0 : index
    %4 = vector.load %arg1[%c0_2, %c0_3, %c0_4] : memref<1x24x128xf32, #tpu.memory_space<vmem>>, vector<1x24x128xf32>
    %5 = vector.shape_cast %4 : vector<1x24x128xf32> to vector<24x128xf32>
    %c0_5 = arith.constant 0 : index
    %c0_6 = arith.constant 0 : index
    %6 = vector.load %arg6[%c0_5, %c0_6] : memref<16x128xf32, #tpu.memory_space<vmem>>, vector<16x128xf32>
    %7 = vector.extract_strided_slice %5 {offsets = [0, 0], sizes = [16, 128], strides = [1, 1]} : vector<24x128xf32> to vector<16x128xf32>
    %8 = arith.subf %3, %7 : vector<16x128xf32>
    %c0_7 = arith.constant 0 : index
    %c0_8 = arith.constant 0 : index
    %c0_9 = arith.constant 0 : index
    %9 = vector.load %arg4[%c0_7, %c0_8, %c0_9] : memref<5x16x128xbf16, #tpu.memory_space<vmem>>, vector<1x16x128xbf16>
    %10 = vector.shape_cast %9 : vector<1x16x128xbf16> to vector<16x128xbf16>
    %11 = arith.extf %10 : vector<16x128xbf16> to vector<16x128xf32>
    %12 = arith.mulf %8, %8 : vector<16x128xf32>
    %13 = arith.mulf %11, %12 : vector<16x128xf32>
    %14 = arith.addf %6, %13 : vector<16x128xf32>
    %15 = vector.extract_strided_slice %5 {offsets = [1, 0], sizes = [16, 128], strides = [1, 1]} : vector<24x128xf32> to vector<16x128xf32>
    %16 = arith.subf %3, %15 : vector<16x128xf32>
    %c1 = arith.constant 1 : index
    %c0_10 = arith.constant 0 : index
    %c0_11 = arith.constant 0 : index
    %17 = vector.load %arg4[%c1, %c0_10, %c0_11] : memref<5x16x128xbf16, #tpu.memory_space<vmem>>, vector<1x16x128xbf16>
    %18 = vector.shape_cast %17 : vector<1x16x128xbf16> to vector<16x128xbf16>
    %19 = arith.extf %18 : vector<16x128xbf16> to vector<16x128xf32>
    %20 = arith.mulf %16, %16 : vector<16x128xf32>
    %21 = arith.mulf %19, %20 : vector<16x128xf32>
    %22 = arith.addf %14, %21 : vector<16x128xf32>
    %23 = vector.extract_strided_slice %5 {offsets = [2, 0], sizes = [16, 128], strides = [1, 1]} : vector<24x128xf32> to vector<16x128xf32>
    %24 = arith.subf %3, %23 : vector<16x128xf32>
    %c2 = arith.constant 2 : index
    %c0_12 = arith.constant 0 : index
    %c0_13 = arith.constant 0 : index
    %25 = vector.load %arg4[%c2, %c0_12, %c0_13] : memref<5x16x128xbf16, #tpu.memory_space<vmem>>, vector<1x16x128xbf16>
    %26 = vector.shape_cast %25 : vector<1x16x128xbf16> to vector<16x128xbf16>
    %27 = arith.extf %26 : vector<16x128xbf16> to vector<16x128xf32>
    %28 = arith.mulf %24, %24 : vector<16x128xf32>
    %29 = arith.mulf %27, %28 : vector<16x128xf32>
    %30 = arith.addf %22, %29 : vector<16x128xf32>
    %31 = vector.extract_strided_slice %5 {offsets = [3, 0], sizes = [16, 128], strides = [1, 1]} : vector<24x128xf32> to vector<16x128xf32>
    %32 = arith.subf %3, %31 : vector<16x128xf32>
    %c3 = arith.constant 3 : index
    %c0_14 = arith.constant 0 : index
    %c0_15 = arith.constant 0 : index
    %33 = vector.load %arg4[%c3, %c0_14, %c0_15] : memref<5x16x128xbf16, #tpu.memory_space<vmem>>, vector<1x16x128xbf16>
    %34 = vector.shape_cast %33 : vector<1x16x128xbf16> to vector<16x128xbf16>
    %35 = arith.extf %34 : vector<16x128xbf16> to vector<16x128xf32>
    %36 = arith.mulf %32, %32 : vector<16x128xf32>
    %37 = arith.mulf %35, %36 : vector<16x128xf32>
    %38 = arith.addf %30, %37 : vector<16x128xf32>
    %39 = vector.extract_strided_slice %5 {offsets = [4, 0], sizes = [16, 128], strides = [1, 1]} : vector<24x128xf32> to vector<16x128xf32>
    %40 = arith.subf %3, %39 : vector<16x128xf32>
    %c4 = arith.constant 4 : index
    %c0_16 = arith.constant 0 : index
    %c0_17 = arith.constant 0 : index
    %41 = vector.load %arg4[%c4, %c0_16, %c0_17] : memref<5x16x128xbf16, #tpu.memory_space<vmem>>, vector<1x16x128xbf16>
    %42 = vector.shape_cast %41 : vector<1x16x128xbf16> to vector<16x128xbf16>
    %43 = arith.extf %42 : vector<16x128xbf16> to vector<16x128xf32>
    %44 = arith.mulf %40, %40 : vector<16x128xf32>
    %45 = arith.mulf %43, %44 : vector<16x128xf32>
    %46 = arith.addf %38, %45 : vector<16x128xf32>
    %c0_18 = arith.constant 0 : index
    %c0_19 = arith.constant 0 : index
    %47 = vector.load %arg6[%c0_18, %c0_19] : memref<16x128xf32, #tpu.memory_space<vmem>>, vector<16x128xf32>
    tpu.vector_store %arg6[%c0_18, %c0_19], %46 {strides = array<i32>} : memref<16x128xf32, #tpu.memory_space<vmem>>, vector<16x128xf32>,
    %c4_i32 = arith.constant 4 : i32
    %48 = arith.cmpi eq, %arg0, %c4_i32 : i32
    %49 = arith.extui %48 : i1 to i32
    %c0_i32_20 = arith.constant 0 : i32
    %50 = arith.cmpi ne, %49, %c0_i32_20 : i32
    scf.if %50 {
      %c0_21 = arith.constant 0 : index
      %c0_22 = arith.constant 0 : index
      %51 = vector.load %arg6[%c0_21, %c0_22] : memref<16x128xf32, #tpu.memory_space<vmem>>, vector<16x128xf32>
      %52 = vector.shape_cast %51 : vector<16x128xf32> to vector<1x16x128xf32>
      %cst = arith.constant dense<0.000000e+00> : vector<1xf32>
      %53 = vector.multi_reduction <add>, %52, %cst [1, 2] : vector<1x16x128xf32> to vector<1xf32>
      %54 = vector.shape_cast %53 : vector<1xf32> to vector<1x1x1xf32>
      %55 = vector.extract %54[0, 0, 0] : f32 from vector<1x1x1xf32>
      %c0_23 = arith.constant 0 : index
      %c0_24 = arith.constant 0 : index
      %56 = vector.load %arg3[%c0_23, %c0_24] : memref<16x128xf32, #tpu.memory_space<vmem>>, vector<16x128xf32>
      %57 = arith.subf %3, %56 : vector<16x128xf32>
      %58 = arith.mulf %57, %57 : vector<16x128xf32>
      %59 = vector.shape_cast %58 : vector<16x128xf32> to vector<1x16x128xf32>
      %cst_25 = arith.constant dense<0.000000e+00> : vector<1xf32>
      %60 = vector.multi_reduction <add>, %59, %cst_25 [1, 2] : vector<1x16x128xf32> to vector<1xf32>
      %61 = vector.shape_cast %60 : vector<1xf32> to vector<1x1x1xf32>
      %62 = vector.extract %61[0, 0, 0] : f32 from vector<1x1x1xf32>
      %cst_26 = arith.constant 6.144000e+03 : f32
      %63 = arith.divf %55, %cst_26 : f32
      %cst_27 = arith.constant 2.560000e+02 : f32
      %cst_28 = arith.constant 1.280000e+02 : f32
      %64 = arith.mulf %cst_27, %cst_28 : f32
      %65 = arith.mulf %64, %63 : f32
      %cst_29 = arith.constant 2.560000e+02 : f32
      %66 = arith.divf %62, %cst_29 : f32
      %67 = arith.addf %65, %66 : f32
      %68 = vector.broadcast %67 : f32 to vector<1x1xf32>
      %c0_30 = arith.constant 0 : index
      %c0_31 = arith.constant 0 : index
      %69 = vector.load %arg5[%c0_30, %c0_31] : memref<1x1xf32, #tpu.memory_space<vmem>>, vector<1x1xf32>
      tpu.vector_store %arg5[%c0_30, %c0_31], %68 {strides = array<i32>} : memref<1x1xf32, #tpu.memory_space<vmem>>, vector<1x1xf32>,
    } else {
    }
    return
  }
  func.func @transform_0(%arg0: i32) -> (i32, i32, i32) {
    %c0_i32 = arith.constant 0 : i32
    %c0_i32_0 = arith.constant 0 : i32
    %c0_i32_1 = arith.constant 0 : i32
    return %arg0, %c0_i32, %c0_i32_0 : i32, i32, i32
  }
  func.func @transform_1(%arg0: i32) -> (i32, i32) {
    %c0_i32 = arith.constant 0 : i32
    %c0_i32_0 = arith.constant 0 : i32
    %c0_i32_1 = arith.constant 0 : i32
    return %c0_i32, %c0_i32_0 : i32, i32
  }
  func.func @transform_2(%arg0: i32) -> (i32, i32) {
    %c0_i32 = arith.constant 0 : i32
    %c0_i32_0 = arith.constant 0 : i32
    %c0_i32_1 = arith.constant 0 : i32
    return %c0_i32, %c0_i32_0 : i32, i32
  }
  func.func @transform_3(%arg0: i32) -> (i32, i32, i32) {
    %c0_i32 = arith.constant 0 : i32
    %c0_i32_0 = arith.constant 0 : i32
    %c0_i32_1 = arith.constant 0 : i32
    return %arg0, %c0_i32, %c0_i32_0 : i32, i32, i32
  }
  func.func @transform_4(%arg0: i32) -> (i32, i32) {
    %c0_i32 = arith.constant 0 : i32
    %c0_i32_0 = arith.constant 0 : i32
    %c0_i32_1 = arith.constant 0 : i32
    return %c0_i32, %c0_i32_0 : i32, i32
  }
}

</mosaic_0001>

<llo_original>
// kernel: tpu_custom_call.1
$region0: #{tpu_custom_call.1}
  #allocation0 [shape = 'u32[]', space=smem, size = 0x4, offset = 0x4, fixed_abs, tag = 'smem constant byte address 0x4 - core index']
  #allocation1 [shape = 'u32[144,128]{1,0:T(1,128)}', space=vmem, size = 0x12000, scoped, tag = 'internal scratch']
  #allocation2 [shape = 'f32[16,128]{1,0:T(8,128)}', space=vmem, size = 0x2000, scoped, tag = 'scratch operand']
  %s0 = inlined_call_operand.hbm [shape: f32[5,24,128], index: 0, kind: input, shape index: {}]
  %s1 = inlined_call_operand.hbm [shape: f32[16,128], index: 1, kind: input, shape index: {}]
  %s2 = inlined_call_operand.hbm [shape: f32[16,128], index: 2, kind: input, shape index: {}]
  %s3 = inlined_call_operand.hbm [shape: bf16[25,16,128], index: 3, kind: input, shape index: {}]
  %s4 = inlined_call_operand.hbm [shape: f32[1,1], index: 4, kind: output, shape index: {}]
  %s5 = sld [smem:[#allocation0]]
  $region73: #{tpu_custom_call.1} parent=0
    _
  %s7 = ssub.s32 1, %s5
  %s8 = scalar_select 0, %s7, %s5
  $region1: #{tpu_custom_call.1} parent=0
    #allocation3 [shape = 'u8[24576]{0}', space=vmem, size = 0x6000, scoped, tag = 'input window, operand 0']
    #allocation4 [shape = 's32[2]{0}', space=sflag, size = 0x8, scoped, tag = 'scoped memory for tpu_custom_call.1']
    #allocation5 [shape = 's32[2]{0}', space=sflag, size = 0x8, scoped, tag = 'scoped memory for tpu_custom_call.1']
    #allocation6 [shape = 'u8[8192]{0}', space=vmem, size = 0x2000, scoped, tag = 'input window, operand 1, single buffered']
    #allocation7 [shape = 's32[1]{0}', space=sflag, size = 0x4, scoped, tag = 'scoped memory for tpu_custom_call.1']
    #allocation8 [shape = 'u8[8192]{0}', space=vmem, size = 0x2000, scoped, tag = 'input window, operand 2, single buffered']
    #allocation9 [shape = 'u8[40960]{0}', space=vmem, size = 0xa000, scoped, tag = 'input window, operand 3']
    #allocation10 [shape = 's32[2]{0}', space=sflag, size = 0x8, scoped, tag = 'scoped memory for tpu_custom_call.1']
    #allocation11 [shape = 'u8[512]{0}', space=vmem, size = 0x400, scoped, tag = 'output window, operand 0, single buffered']
    %9 = vsyncpa [#allocation4], 0
    %s10 = scalar_lea.sflag [#allocation4], 1
    %11 = vsyncpa %s10, 0
    %12 = vsyncpa [#allocation7], 0
    %13 = vsyncpa [#allocation10], 0
    %s14 = scalar_lea.sflag [#allocation10], 1
    %15 = vsyncpa %s14, 0
    %16 = vsyncpa [#allocation5], 0
    loop: start=0, step=1, limit=7
    $region2: #{tpu_custom_call.1} parent=1 // loop_pre_header
      _
    $region3: #{tpu_custom_call.1} parent=1 // loop_header
      %s18 = sphi 0, %s22
      %p19 = scmp.ge.s32.totalorder %s18, 7
      %s28 = sphi 0, %s30
      %s31 = sphi 0, %s28
      %s32 = sphi 0, %s31
      %s48 = sphi 0, %s32
      %s52 = sphi 0, %s52
      %s54 = sphi 0, %s52
      %s55 = sphi 0, %s54
      %s69 = sphi 0, %s55
      %s73 = sphi 0, %s73
      %s75 = sphi 0, %s73
      %s76 = sphi 0, %s75
      %s90 = sphi 0, %s76
      %s96 = sphi 0, %s98
      %s99 = sphi 0, %s96
      %s100 = sphi 0, %s99
      %s116 = sphi 0, %s100
      %s120 = sphi 0, %s120
      %s122 = sphi 0, %s120
      %s123 = sphi 0, %s122
      %s137 = sphi 0, %s123
    $region4: #{tpu_custom_call.1} parent=1 // loop_header_branch
      %21 = sbr.rel (%p19) target = $region8
    $region5: #{tpu_custom_call.1} parent=1 // loop_body
      %s23 = ssub.s32 %s18, 1
      %s24 = ssub.s32 %s18, 2
      %s25 = sadd.s32 %s18, 1
      %s26 = ssub.s32 %s18, %s25
      %p27 = scmp.eq.s32.totalorder %s26, 0
      %s29 = sadd.s32 %s28, 1
      %s30 = scalar_select %p27, %s28, %s29
      %p33 = pneg %p27
      %p34 = scmp.eq.s32.totalorder %s18, 4
      %p35 = por %p33, %p34
      %p36 = scmp.ne.s32.totalorder %s28, %s31
      %p37 = scmp.eq.s32.totalorder %s18, 0
      %p38 = por %p36, %p37
      %p39 = scmp.ne.s32.totalorder %s28, %s31
      %p40 = scmp.eq.s32.totalorder %s23, 4
      %p41 = por %p39, %p40
      %p42 = scmp.ne.s32.totalorder %s31, %s32
      %p43 = scmp.eq.s32.totalorder %s23, 0
      %p44 = por %p42, %p43
      %p45 = scmp.ne.s32.totalorder %s31, %s32
      %p46 = scmp.eq.s32.totalorder %s24, 4
      %p47 = por %p45, %p46
      %p49 = scmp.ne.s32.totalorder %s32, %s48
      %p50 = scmp.eq.s32.totalorder %s24, 0
      %p51 = por %p49, %p50
      %s53 = sadd.s32 %s52, 1
      %p56 = scmp.eq.s32.totalorder %s18, 4
      %p57 = scmp.ne.s32.totalorder %s52, %s54
      %p58 = scmp.eq.s32.totalorder %s18, 0
      %p59 = por %p57, %p58
      %p60 = scmp.ne.s32.totalorder %s52, %s54
      %p61 = scmp.eq.s32.totalorder %s23, 4
      %p62 = por %p60, %p61
      %p63 = scmp.ne.s32.totalorder %s54, %s55
      %p64 = scmp.eq.s32.totalorder %s23, 0
      %p65 = por %p63, %p64
      %p66 = scmp.ne.s32.totalorder %s54, %s55
      %p67 = scmp.eq.s32.totalorder %s24, 4
      %p68 = por %p66, %p67
      %p70 = scmp.ne.s32.totalorder %s55, %s69
      %p71 = scmp.eq.s32.totalorder %s24, 0
      %p72 = por %p70, %p71
      %s74 = sadd.s32 %s73, 1
      %p77 = scmp.eq.s32.totalorder %s18, 4
      %p78 = scmp.ne.s32.totalorder %s73, %s75
      %p79 = scmp.eq.s32.totalorder %s18, 0
      %p80 = por %p78, %p79
      %p81 = scmp.ne.s32.totalorder %s73, %s75
      %p82 = scmp.eq.s32.totalorder %s23, 4
      %p83 = por %p81, %p82
      %p84 = scmp.ne.s32.totalorder %s75, %s76
      %p85 = scmp.eq.s32.totalorder %s23, 0
      %p86 = por %p84, %p85
      %p87 = scmp.ne.s32.totalorder %s75, %s76
      %p88 = scmp.eq.s32.totalorder %s24, 4
      %p89 = por %p87, %p88
      %p91 = scmp.ne.s32.totalorder %s76, %s90
      %p92 = scmp.eq.s32.totalorder %s24, 0
      %p93 = por %p91, %p92
      %s94 = ssub.s32 %s18, %s25
      %p95 = scmp.eq.s32.totalorder %s94, 0
      %s97 = sadd.s32 %s96, 1
      %s98 = scalar_select %p95, %s96, %s97
      %p101 = pneg %p95
      %p102 = scmp.eq.s32.totalorder %s18, 4
      %p103 = por %p101, %p102
      %p104 = scmp.ne.s32.totalorder %s96, %s99
      %p105 = scmp.eq.s32.totalorder %s18, 0
      %p106 = por %p104, %p105
      %p107 = scmp.ne.s32.totalorder %s96, %s99
      %p108 = scmp.eq.s32.totalorder %s23, 4
      %p109 = por %p107, %p108
      %p110 = scmp.ne.s32.totalorder %s99, %s100
      %p111 = scmp.eq.s32.totalorder %s23, 0
      %p112 = por %p110, %p111
      %p113 = scmp.ne.s32.totalorder %s99, %s100
      %p114 = scmp.eq.s32.totalorder %s24, 4
      %p115 = por %p113, %p114
      %p117 = scmp.ne.s32.totalorder %s100, %s116
      %p118 = scmp.eq.s32.totalorder %s24, 0
      %p119 = por %p117, %p118
      %s121 = sadd.s32 %s120, 1
      %p124 = scmp.eq.s32.totalorder %s18, 4
      %p125 = scmp.ne.s32.totalorder %s120, %s122
      %p126 = scmp.eq.s32.totalorder %s18, 0
      %p127 = por %p125, %p126
      %p128 = scmp.ne.s32.totalorder %s120, %s122
      %p129 = scmp.eq.s32.totalorder %s23, 4
      %p130 = por %p128, %p129
      %p131 = scmp.ne.s32.totalorder %s122, %s123
      %p132 = scmp.eq.s32.totalorder %s23, 0
      %p133 = por %p131, %p132
      %p134 = scmp.ne.s32.totalorder %s122, %s123
      %p135 = scmp.eq.s32.totalorder %s24, 4
      %p136 = por %p134, %p135
      %p138 = scmp.ne.s32.totalorder %s123, %s137
      %p139 = scmp.eq.s32.totalorder %s24, 0
      %p140 = por %p138, %p139
      %p141 = scmp.le.s32.totalorder 1, %s18
      %p142 = scmp.lt.s32.totalorder %s18, 6
      %p143 = pnand %p141, %p142
      %p144 = pneg %p143
      // Predicated region
      $region9: #{tpu_custom_call.1} parent=5 // pred_check
        _
      $region10: #{tpu_custom_call.1} parent=5 // pred_check_branch
        %146 = sbr.rel (%p143) target = $region12
      $region11: #{tpu_custom_call.1} parent=5 // pred_region
        %s147 = ssub.s32 %s18, 1
        // Predicated region
        $region13: #{tpu_custom_call.1} parent=11 // pred_check
          %p148 = pneg %p65
        $region14: #{tpu_custom_call.1} parent=11 // pred_check_branch
          %150 = sbr.rel (%p148) target = $region16
        $region15: #{tpu_custom_call.1} parent=11 // pred_region
          %s152 = ssub.s32 256, 256
          %153 = vsyncadd [#allocation7], %s152
          %s154 = sshll.u32 [#allocation6], 4
          %s155 = int_to_ptr.vmem [resolvable:$true] %s154
          %160 = dma.hbm_to_vmem [thread:$0]  %s1, 256, %s155, [#allocation7], 128, 128, 8
        $region16: #{tpu_custom_call.1} parent=11 // pred_fallthru
          _
        // Predicated region
        $region17: #{tpu_custom_call.1} parent=11 // pred_check
          %p161 = pneg %p86
        $region18: #{tpu_custom_call.1} parent=11 // pred_check_branch
          %163 = sbr.rel (%p161) target = $region20
        $region19: #{tpu_custom_call.1} parent=11 // pred_region
          %s165 = ssub.s32 256, 256
          %166 = vsyncadd [#allocation7], %s165
          %s167 = sshll.u32 [#allocation8], 4
          %s168 = int_to_ptr.vmem [resolvable:$true] %s167
          %173 = dma.hbm_to_vmem [thread:$0]  %s2, 256, %s168, [#allocation7], 128, 128, 8
        $region20: #{tpu_custom_call.1} parent=11 // pred_fallthru
          _
      $region12: #{tpu_custom_call.1} parent=5 // pred_fallthru
        _
      %p174 = scmp.lt.s32.totalorder %s18, 5
      // Predicated region
      $region21: #{tpu_custom_call.1} parent=5 // pred_check
        %p175 = pneg %p174
      $region22: #{tpu_custom_call.1} parent=5 // pred_check_branch
        %177 = sbr.rel (%p175) target = $region24
      $region23: #{tpu_custom_call.1} parent=5 // pred_region
        // Predicated region
        $region25: #{tpu_custom_call.1} parent=23 // pred_check
          %p178 = pneg %p38
        $region26: #{tpu_custom_call.1} parent=23 // pred_check_branch
          %180 = sbr.rel (%p178) target = $region28
        $region27: #{tpu_custom_call.1} parent=23 // pred_region
          %s181 = sand.u32 %s28, 1
          %s182 = scalar_lea.sflag [#allocation4], %s181
          %s183 = sand.u32 %s28, 1
          %s184 = smul.addr %s183, 24
          %s185 = scalar_lea.vmem [#allocation3], %s184
          %s187 = ssub.s32 384, 384
          %188 = vsyncadd %s182, %s187
          %s189 = smul.addr %s18, 3
          %s190 = smul.addr %s189, 128
          %s191 = scalar_lea.hbm %s0, %s190
          %s192 = sshll.u32 %s185, 4
          %s193 = int_to_ptr.vmem [resolvable:$true] %s192
          %198 = dma.hbm_to_vmem [thread:$0]  %s191, 384, %s193, %s182, 128, 128, 8
        $region28: #{tpu_custom_call.1} parent=23 // pred_fallthru
          _
        // Predicated region
        $region29: #{tpu_custom_call.1} parent=23 // pred_check
          %p199 = pneg %p106
        $region30: #{tpu_custom_call.1} parent=23 // pred_check_branch
          %201 = sbr.rel (%p199) target = $region32
        $region31: #{tpu_custom_call.1} parent=23 // pred_region
          %s202 = sand.u32 %s96, 1
          %s203 = scalar_lea.sflag [#allocation10], %s202
          %s204 = sand.u32 %s96, 1
          %s205 = smul.addr %s204, 40
          %s206 = scalar_lea.vmem [#allocation9], %s205
          %s207 = smul.u32 5, %s18
          %s209 = ssub.s32 640, 640
          %210 = vsyncadd %s203, %s209
          %s211 = smul.addr %s207, 2
          %s212 = smul.addr %s211, 64
          %s213 = scalar_lea.hbm %s3, %s212
          %s214 = sshll.u32 %s206, 4
          %s215 = int_to_ptr.vmem [resolvable:$true] %s214
          %220 = dma.hbm_to_vmem [thread:$0]  %s213, 640, %s215, %s203, 64, 64, 4
        $region32: #{tpu_custom_call.1} parent=23 // pred_fallthru
          _
      $region24: #{tpu_custom_call.1} parent=5 // pred_fallthru
        _
      %p221 = scmp.le.s32.totalorder 1, %s18
      %p222 = scmp.lt.s32.totalorder %s18, 6
      %p223 = pnand %p221, %p222
      %p224 = pneg %p223
      // Predicated region
      $region33: #{tpu_custom_call.1} parent=5 // pred_check
        _
      $region34: #{tpu_custom_call.1} parent=5 // pred_check_branch
        %226 = sbr.rel (%p223) target = $region36
      $region35: #{tpu_custom_call.1} parent=5 // pred_region
        %s227 = ssub.s32 %s18, 1
        %s228 = sand.u32 %s31, 1
        %s229 = scalar_lea.sflag [#allocation4], %s228
        %s230 = sand.u32 %s31, 1
        %s231 = smul.addr %s230, 24
        %s232 = scalar_lea.vmem [#allocation3], %s231
        // Predicated region
        $region37: #{tpu_custom_call.1} parent=35 // pred_check
          %p233 = pneg %p44
        $region38: #{tpu_custom_call.1} parent=35 // pred_check_branch
          %235 = sbr.rel (%p233) target = $region40
        $region39: #{tpu_custom_call.1} parent=35 // pred_region
          %236 = dma.done %s229, 384
        $region40: #{tpu_custom_call.1} parent=35 // pred_fallthru
          _
        // Predicated region
        $region41: #{tpu_custom_call.1} parent=35 // pred_check
          %p237 = pneg %p65
        $region42: #{tpu_custom_call.1} parent=35 // pred_check_branch
          %239 = sbr.rel (%p237) target = $region44
        $region43: #{tpu_custom_call.1} parent=35 // pred_region
          %240 = dma.done [#allocation7], 256
        $region44: #{tpu_custom_call.1} parent=35 // pred_fallthru
          _
        // Predicated region
        $region45: #{tpu_custom_call.1} parent=35 // pred_check
          %p241 = pneg %p86
        $region46: #{tpu_custom_call.1} parent=35 // pred_check_branch
          %243 = sbr.rel (%p241) target = $region48
        $region47: #{tpu_custom_call.1} parent=35 // pred_region
          %244 = dma.done [#allocation7], 256
        $region48: #{tpu_custom_call.1} parent=35 // pred_fallthru
          _
        %s245 = sand.u32 %s99, 1
        %s246 = scalar_lea.sflag [#allocation10], %s245
        %s247 = sand.u32 %s99, 1
        %s248 = smul.addr %s247, 40
        %s249 = scalar_lea.vmem [#allocation9], %s248
        // Predicated region
        $region49: #{tpu_custom_call.1} parent=35 // pred_check
          %p250 = pneg %p112
        $region50: #{tpu_custom_call.1} parent=35 // pred_check_branch
          %252 = sbr.rel (%p250) target = $region52
        $region51: #{tpu_custom_call.1} parent=35 // pred_region
          %253 = dma.done %s246, 640
        $region52: #{tpu_custom_call.1} parent=35 // pred_fallthru
          _
        %s254 = sand.u32 %s31, 1
        %s255 = scalar_lea.sflag [#allocation4], %s254
        %s256 = sand.u32 %s31, 1
        %s257 = smul.addr %s256, 24
        %s258 = scalar_lea.vmem [#allocation3], %s257
        %p259 = pneg %p44
        %p260 = pneg %p41
        %p261 = pneg %p65
        %p262 = pneg %p62
        %p263 = pneg %p86
        %p264 = pneg %p83
        %s265 = sand.u32 %s99, 1
        %s266 = scalar_lea.sflag [#allocation10], %s265
        %s267 = sand.u32 %s99, 1
        %s268 = smul.addr %s267, 40
        %s269 = scalar_lea.vmem [#allocation9], %s268
        %p270 = pneg %p112
        %p271 = pneg %p109
        %p272 = pneg %p133
        %p273 = pneg %p130
        %s274 = smul.u32 5, %s23
        %p275 = scmp.eq.s32.totalorder %s23, 0
        // Predicated region
        $region53: #{tpu_custom_call.1} parent=35 // pred_check
          %p276 = pneg %p275
        $region54: #{tpu_custom_call.1} parent=35 // pred_check_branch
          %278 = sbr.rel (%p276) target = $region56
        $region55: #{tpu_custom_call.1} parent=35 // pred_region
          %279 = vst [vmem:[#allocation2] sm:$0xff] 0.0
          %280 = vst [vmem:[#allocation2 + $0x8] sm:$0xff] 0.0
        $region56: #{tpu_custom_call.1} parent=35 // pred_fallthru
          _
        %v281 = vld [vmem:[#allocation6] sm:$0xff]
        %v282 = vld [vmem:[#allocation6 + $0x8] sm:$0xff]
        %v283 = vld [vmem:[%s232] sm:$0xff]
        %v284 = vld [vmem:[%s232 + $0x8] sm:$0xff]
        %v285 = vld [vmem:[%s232 + $0x10] sm:$0xff]
        %v286 = vld [vmem:[#allocation2] sm:$0xff]
        %v287 = vld [vmem:[#allocation2 + $0x8] sm:$0xff]
        %v288 = vsub.f32 %v281, %v283
        %v289 = vsub.f32 %v282, %v284
        %v290 = vld [vmem:[%s249] sm:$0xf]
        %v291 = vld [vmem:[%s249 + $0x4] sm:$0xf]
        %v292 = vunpack.c.l.bf16 %v290
        %v293 = vunpack.c.l.bf16 %v291
        %v294 = vmul.f32 %v288, %v288
        %v295 = vmul.f32 %v289, %v289
        %v296 = vmul.f32 %v292, %v294
        %v297 = vmul.f32 %v293, %v295
        %v298 = vadd.f32 %v286, %v296
        %v299 = vadd.f32 %v287, %v297
        %vm303 = vcmask 1046528
        %v304 = vrot.slane %v283, 1
        %v305 = vrot.slane %v284, 1
        %v306 = vsel %vm303, %v304, %v305
        %v307 = vrot.slane %v285, 1
        %v308 = vsel %vm303, %v305, %v307
        %v311 = vsub.f32 %v281, %v306
        %v312 = vsub.f32 %v282, %v308
        %s313 = scalar_lea.vmem %s249, 8 [#allocation9]
        %v314 = vld [vmem:[%s313] sm:$0xf]
        %v315 = vld [vmem:[%s313 + $0x4] sm:$0xf]
        %v316 = vunpack.c.l.bf16 %v314
        %v317 = vunpack.c.l.bf16 %v315
        %v318 = vmul.f32 %v311, %v311
        %v319 = vmul.f32 %v312, %v312
        %v320 = vmul.f32 %v316, %v318
        %v321 = vmul.f32 %v317, %v319
        %v322 = vadd.f32 %v298, %v320
        %v323 = vadd.f32 %v299, %v321
        %vm324 = vcmask 1045504
        %v325 = vrot.slane %v283, 2
        %v326 = vrot.slane %v284, 2
        %v327 = vsel %vm324, %v325, %v326
        %v328 = vrot.slane %v285, 2
        %v329 = vsel %vm324, %v326, %v328
        %v332 = vsub.f32 %v281, %v327
        %v333 = vsub.f32 %v282, %v329
        %s334 = scalar_lea.vmem %s249, 16 [#allocation9]
        %v335 = vld [vmem:[%s334] sm:$0xf]
        %v336 = vld [vmem:[%s334 + $0x4] sm:$0xf]
        %v337 = vunpack.c.l.bf16 %v335
        %v338 = vunpack.c.l.bf16 %v336
        %v339 = vmul.f32 %v332, %v332
        %v340 = vmul.f32 %v333, %v333
        %v341 = vmul.f32 %v337, %v339
        %v342 = vmul.f32 %v338, %v340
        %v343 = vadd.f32 %v322, %v341
        %v344 = vadd.f32 %v323, %v342
        %vm345 = vcmask 1044480
        %v346 = vrot.slane %v283, 3
        %v347 = vrot.slane %v284, 3
        %v348 = vsel %vm345, %v346, %v347
        %v349 = vrot.slane %v285, 3
        %v350 = vsel %vm345, %v347, %v349
        %v353 = vsub.f32 %v281, %v348
        %v354 = vsub.f32 %v282, %v350
        %s355 = scalar_lea.vmem %s249, 24 [#allocation9]
        %v356 = vld [vmem:[%s355] sm:$0xf]
        %v357 = vld [vmem:[%s355 + $0x4] sm:$0xf]
        %v358 = vunpack.c.l.bf16 %v356
        %v359 = vunpack.c.l.bf16 %v357
        %v360 = vmul.f32 %v353, %v353
        %v361 = vmul.f32 %v354, %v354
        %v362 = vmul.f32 %v358, %v360
        %v363 = vmul.f32 %v359, %v361
        %v364 = vadd.f32 %v343, %v362
        %v365 = vadd.f32 %v344, %v363
        %vm366 = vcmask 1043456
        %v367 = vrot.slane %v283, 4
        %v368 = vrot.slane %v284, 4
        %v369 = vsel %vm366, %v367, %v368
        %v370 = vrot.slane %v285, 4
        %v371 = vsel %vm366, %v368, %v370
        %v374 = vsub.f32 %v281, %v369
        %v375 = vsub.f32 %v282, %v371
        %s376 = scalar_lea.vmem %s249, 32 [#allocation9]
        %v377 = vld [vmem:[%s376] sm:$0xf]
        %v378 = vld [vmem:[%s376 + $0x4] sm:$0xf]
        %v379 = vunpack.c.l.bf16 %v377
        %v380 = vunpack.c.l.bf16 %v378
        %v381 = vmul.f32 %v374, %v374
        %v382 = vmul.f32 %v375, %v375
        %v383 = vmul.f32 %v379, %v381
        %v384 = vmul.f32 %v380, %v382
        %v385 = vadd.f32 %v364, %v383
        %v386 = vadd.f32 %v365, %v384
        %387 = vst [vmem:[#allocation2] sm:$0xff] %v385
        %388 = vst [vmem:[#allocation2 + $0x8] sm:$0xff] %v386
        %p389 = scmp.eq.s32.totalorder %s23, 4
        // Predicated region
        $region57: #{tpu_custom_call.1} parent=35 // pred_check
          %p390 = pneg %p389
        $region58: #{tpu_custom_call.1} parent=35 // pred_check_branch
          %392 = sbr.rel (%p390) target = $region60
        $region59: #{tpu_custom_call.1} parent=35 // pred_region
          %v393 = vld [vmem:[#allocation2] sm:$0xff]
          %v394 = vld [vmem:[#allocation2 + $0x8] sm:$0xff]
          %v395 = vadd.f32 %v393, %v394
          %396 = vadd.xlane.f32.xlu0 %v395
          %v397 = vpop.xlane.xlu0 %396
          %v398 = vrot.slane %v397, 4
          %v399 = vadd.f32 %v397, %v398
          %v400 = vrot.slane %v399, 2
          %v401 = vadd.f32 %v399, %v400
          %v402 = vrot.slane %v401, 1
          %v403 = vadd.f32 %v401, %v402
          %s404 = vtos %v403
          %v405 = vld [vmem:[#allocation8] sm:$0xff]
          %v406 = vld [vmem:[#allocation8 + $0x8] sm:$0xff]
          %v407 = vsub.f32 %v281, %v405
          %v408 = vsub.f32 %v282, %v406
          %v409 = vmul.f32 %v407, %v407
          %v410 = vmul.f32 %v408, %v408
          %v411 = vadd.f32 %v409, %v410
          %412 = vadd.xlane.f32.xlu0 %v411
          %v413 = vpop.xlane.xlu0 %412
          %v414 = vrot.slane %v413, 4
          %v415 = vadd.f32 %v413, %v414
          %v416 = vrot.slane %v415, 2
          %v417 = vadd.f32 %v415, %v416
          %v418 = vrot.slane %v417, 1
          %v419 = vadd.f32 %v417, %v418
          %s420 = vtos %v419
          %v421 = vrcp.pop 6144.0
          %s422 = vtos %v421
          %s423 = smul.f32 %s404, %s422
          %s424 = smul.f32 %s423, 32768.0
          %v425 = vrcp.pop 256.0
          %s426 = vtos %v425
          %s427 = smul.f32 %s420, %s426
          %s428 = sadd.f32 %s424, %s427
          %v429 = vstv %s428
          %vm430 = vcmask 0
          %431 = vst.msk [vmem:[#allocation11] sm:$0x1] %vm430, %v429
        $region60: #{tpu_custom_call.1} parent=35 // pred_fallthru
          _
        // Predicated region
        $region61: #{tpu_custom_call.1} parent=35 // pred_check
          %p432 = pneg %p130
        $region62: #{tpu_custom_call.1} parent=35 // pred_check_branch
          %434 = sbr.rel (%p432) target = $region64
        $region63: #{tpu_custom_call.1} parent=35 // pred_region
          %s436 = ssub.s32 16, 16
          %437 = vsyncadd [#allocation5], %s436
          %s439 = sshll.u32 [#allocation11], 4
          %s440 = int_to_ptr.vmem [resolvable:$true] %s439
          %442 = dma.vmem_to_hbm [thread:$0]  %s440, 16, %s4, [#allocation5]
        $region64: #{tpu_custom_call.1} parent=35 // pred_fallthru
          _
        // Predicated region
        $region65: #{tpu_custom_call.1} parent=35 // pred_check
          %p443 = pneg %p130
        $region66: #{tpu_custom_call.1} parent=35 // pred_check_branch
          %445 = sbr.rel (%p443) target = $region68
        $region67: #{tpu_custom_call.1} parent=35 // pred_region
          %446 = dma.done [#allocation5], 16
        $region68: #{tpu_custom_call.1} parent=35 // pred_fallthru
          _
      $region36: #{tpu_custom_call.1} parent=5 // pred_fallthru
        _
      %p447 = scmp.le.s32.totalorder 2, %s18
      // Predicated region
      $region69: #{tpu_custom_call.1} parent=5 // pred_check
        %p448 = pneg %p447
      $region70: #{tpu_custom_call.1} parent=5 // pred_check_branch
        %450 = sbr.rel (%p448) target = $region72
      $region71: #{tpu_custom_call.1} parent=5 // pred_region
        %s451 = ssub.s32 %s18, 2
      $region72: #{tpu_custom_call.1} parent=5 // pred_fallthru
        _
    $region6: #{tpu_custom_call.1} parent=1 // loop_footer
      %s22 = sadd.s32 1, %s18
    $region7: #{tpu_custom_call.1} parent=1 // loop_footer_branch
      %17 = sbr.rel target = $region3
    $region8: #{tpu_custom_call.1} parent=1 // loop_exit
      _
    %452 = vsyncpa [#allocation4], 1
    %s453 = scalar_lea.sflag [#allocation4], 1
    %454 = vsyncpa %s453, 1
    %455 = vsyncpa [#allocation7], 1
    %456 = vsyncpa [#allocation10], 1
    %s457 = scalar_lea.sflag [#allocation10], 1
    %458 = vsyncpa %s457, 1
    %459 = vsyncpa [#allocation5], 1
    %s460 = scalar_lea.sflag [#allocation5], 1
    %461 = vsyncpa %s460, 1

</llo_original>
